<compile_context>
chip_gen: v6e
topology: v6e:2x2x1
jax: 0.10.0
libtpu: 0.0.40
codegen_flags: <defaults>
</compile_context>

<pallas_src>
import jax
import jax.numpy as jnp
from jax.experimental import pallas as pl
from jax.experimental.pallas import tpu as pltpu


def _lora_kernel(x_ref, a_ref, b_ref, gate_ref, out_ref):
    """One (batch, seq-tile) grid step.

    x_ref   : (1, TS, H)  hidden_states tile (dropout is identity, p=0)
    a_ref   : (H, r)      lora_A pre-transposed
    b_ref   : (r, out)    lora_B pre-transposed
    gate_ref: (B,)        per-batch gate scalar, SMEM, f32
    out_ref : (1, TS, out)
    """
    b = pl.program_id(0)
    x = x_ref[0]                                                       # (TS, H)

    # hidden_states @ lora_A.T @ lora_B.T  (weights already transposed -> plain dots)
    tmp = jnp.dot(x, a_ref[...], preferred_element_type=jnp.float32)   # (TS, r)
    h = jnp.dot(tmp, b_ref[...], preferred_element_type=jnp.float32)   # (TS, out)

    # gating_heads == 1 -> scalar broadcast (matches torch (B,1,1) * (B,S,out))
    g = gate_ref[b]                                                    # f32 scalar from SMEM
    out_ref[0] = (h * g).astype(out_ref.dtype)


def _pick_seq_tile(S, H, out_dim, itemsize):
    """Largest sequence tile s.t. (x block + out block) * 2 pipeline buffers <= ~24 MiB."""
    budget = 24 * 1024 * 1024
    row_bytes = (H + out_dim) * itemsize * 2
    ts = budget // max(row_bytes, 1)
    ts = min(ts, 1024, S)
    if ts >= S:
        return S
    return max(8, (ts // 8) * 8)  # keep (8,128) sublane divisibility for partial tiles


def lora_forward(hidden_states, layer_input, lora_A, lora_B, gate_w, gate_b):
    if hidden_states is None:
        hidden_states = layer_input

    B, S, H = hidden_states.shape
    r, H_a = lora_A.shape
    out_dim, r_b = lora_B.shape
    assert H_a == H and r_b == r
    heads = gate_w.shape[0]
    assert heads == 1, "broadcasting in torch forward only well-defined for gating_heads=1"

    # ---- gate pre-pass (tiny GEMV + mean over S; plain XLA, layer_input read once) ----
    logits = jnp.einsum("bsh,gh->bsg", layer_input, gate_w) + gate_b        # (B, S, heads)
    gate = jax.nn.sigmoid(logits.astype(jnp.float32))
    gate_mean = jnp.mean(gate, axis=1)                                      # (B, heads) f32
    gate_out = gate_mean[..., None]                                         # (B, heads, 1)
    gate_scalars = gate_mean[:, 0].astype(jnp.float32)                      # (B,) -> SMEM

    # ---- pre-transpose weights once (lane-dense MXU operands, no in-kernel .T) ----
    lora_A_t = lora_A.T          # (H, r)
    lora_B_t = lora_B.T          # (r, out)

    # ---- main kernel: tiled over (batch, sequence) ----
    ts = _pick_seq_tile(S, H, out_dim, hidden_states.dtype.itemsize)
    grid = (B, pl.cdiv(S, ts))

    out = pl.pallas_call(
        _lora_kernel,
        out_shape=jax.ShapeDtypeStruct((B, S, out_dim), hidden_states.dtype),
        grid=grid,
        in_specs=[
            pl.BlockSpec((1, ts, H), lambda b, s: (b, s, 0)),          # hidden_states tile
            pl.BlockSpec((H, r), lambda b, s: (0, 0)),                 # lora_A.T (resident)
            pl.BlockSpec((r, out_dim), lambda b, s: (0, 0)),           # lora_B.T (resident)
            pl.BlockSpec(memory_space=pltpu.MemorySpace.SMEM),         # per-batch gate scalar
        ],
        out_specs=pl.BlockSpec((1, ts, out_dim), lambda b, s: (b, s, 0)),
        compiler_params=pltpu.CompilerParams(
            dimension_semantics=("parallel", "parallel"),
            vmem_limit_bytes=48 * 1024 * 1024,
        ),
    )(hidden_states, lora_A_t, lora_B_t, gate_scalars)

    return out, gate_out


def lora_ref(hidden_states, layer_input, lora_A, lora_B, gate_w, gate_b):
    """Pure-JAX reference mirroring the PyTorch forward."""
    h = hidden_states @ lora_A.T @ lora_B.T
    gate = jax.nn.sigmoid(jnp.einsum("bsh,gh->bsg", layer_input, gate_w) + gate_b)
    gate = jnp.mean(gate, axis=1)[..., None]   # (B, heads, 1)
    return h * gate, gate


if __name__ == "__main__":
    # Small shapes consistent with the module: LoRA on an (H -> out) projection.
    B, S, H = 2, 8, 32       # batch, seq, hidden (in_features)
    out_dim, r = 32, 4       # lora_B_shape = (out, r), lora_A_shape = (r, H)
    heads = 1                # gating_heads

    key = jax.random.PRNGKey(0)
    k_x, k_li, k_a, k_b, k_g = jax.random.split(key, 5)

    hidden_states = jax.random.normal(k_x, (B, S, H), dtype=jnp.float32)
    layer_input = jax.random.normal(k_li, (B, S, H), dtype=jnp.float32)

    # Deterministic "bert"-style init (normal, std=0.02) so the delta is nonzero.
    lora_A = 0.02 * jax.random.normal(k_a, (r, H), dtype=jnp.float32)
    lora_B = 0.02 * jax.random.normal(k_b, (out_dim, r), dtype=jnp.float32)
    gate_w = 0.02 * jax.random.normal(k_g, (heads, H), dtype=jnp.float32)
    gate_b = jnp.zeros((heads,), dtype=jnp.float32)
    # TODO(synk): dropout > 0 (training mode) not implemented; forward here matches eval / p=0.

    out, gate = lora_forward(hidden_states, layer_input, lora_A, lora_B, gate_w, gate_b)
    out = jax.block_until_ready(out)
    gate = jax.block_until_ready(gate)

    ref_out, ref_gate = lora_ref(hidden_states, layer_input, lora_A, lora_B, gate_w, gate_b)
    assert out.shape == (B, S, out_dim) and gate.shape == (B, heads, 1)
    assert jnp.allclose(out, ref_out, atol=1e-5, rtol=1e-5)
    assert jnp.allclose(gate, ref_gate, atol=1e-6, rtol=1e-6)

    print("KERNEL_OK")
</pallas_src>

<mosaic_0001>
module attributes {stable_mosaic.version = 11 : i64} {
  func.func @_lora_kernel(%arg0: i32, %arg1: i32, %arg2: memref<1x8x32xf32, #tpu.memory_space<vmem>>, %arg3: memref<32x4xf32, #tpu.memory_space<vmem>>, %arg4: memref<4x32xf32, #tpu.memory_space<vmem>>, %arg5: memref<2xf32, #tpu.memory_space<smem>>, %arg6: memref<1x8x32xf32, #tpu.memory_space<vmem>>) attributes {dimension_semantics = [#tpu.dimension_semantics<parallel>, #tpu.dimension_semantics<parallel>], iteration_bounds = array<i64: 2, 1>, scalar_prefetch = 0 : i64, scratch_operands = 0 : i64, tpu.core_type = #tpu.core_type<tc>, window_params = [{transform_indices = @transform_0, window_bounds = array<i64: 1, 8, 32>}, {pipeline_mode = #tpu.pipeline_mode<synchronous>, transform_indices = @transform_1, window_bounds = array<i64: 32, 4>}, {pipeline_mode = #tpu.pipeline_mode<synchronous>, transform_indices = @transform_2, window_bounds = array<i64: 4, 32>}, {transform_indices = @transform_3, window_bounds = array<i64: 2>}, {transform_indices = @transform_4, window_bounds = array<i64: 1, 8, 32>}]} {
    %c0 = arith.constant 0 : index
    %c0_0 = arith.constant 0 : index
    %c0_1 = arith.constant 0 : index
    %0 = vector.load %arg2[%c0, %c0_0, %c0_1] : memref<1x8x32xf32, #tpu.memory_space<vmem>>, vector<1x8x32xf32>
    %1 = vector.shape_cast %0 : vector<1x8x32xf32> to vector<8x32xf32>
    %c0_2 = arith.constant 0 : index
    %c0_3 = arith.constant 0 : index
    %2 = vector.load %arg3[%c0_2, %c0_3] : memref<32x4xf32, #tpu.memory_space<vmem>>, vector<32x4xf32>
    %cst = arith.constant dense<0.000000e+00> : vector<8x4xf32>
    %3 = tpu.matmul %1, %2, %cst {dimension_numbers = #tpu.dot_dimension_numbers<[1], [0], [0], [1], [0, 0, 1, 1], [], []>} : vector<8x32xf32>, vector<32x4xf32>, vector<8x4xf32> -> vector<8x4xf32>
    %c0_4 = arith.constant 0 : index
    %c0_5 = arith.constant 0 : index
    %4 = vector.load %arg4[%c0_4, %c0_5] : memref<4x32xf32, #tpu.memory_space<vmem>>, vector<4x32xf32>
    %cst_6 = arith.constant dense<0.000000e+00> : vector<8x32xf32>
    %5 = tpu.matmul %3, %4, %cst_6 {dimension_numbers = #tpu.dot_dimension_numbers<[1], [0], [0], [1], [0, 0, 1, 1], [], []>} : vector<8x4xf32>, vector<4x32xf32>, vector<8x32xf32> -> vector<8x32xf32>
    %6 = arith.index_cast %arg0 : i32 to index
    %7 = memref.load %arg5[%6] : memref<2xf32, #tpu.memory_space<smem>>
    %8 = vector.broadcast %7 : f32 to vector<8x32xf32>
    %9 = arith.mulf %5, %8 : vector<8x32xf32>
    %c0_7 = arith.constant 0 : index
    %c0_8 = arith.constant 0 : index
    %c0_9 = arith.constant 0 : index
    %10 = vector.load %arg6[%c0_7, %c0_8, %c0_9] : memref<1x8x32xf32, #tpu.memory_space<vmem>>, vector<1x8x32xf32>
    %11 = vector.shape_cast %10 : vector<1x8x32xf32> to vector<8x32xf32>
    %12 = vector.shape_cast %9 : vector<8x32xf32> to vector<1x8x32xf32>
    tpu.vector_store %arg6[%c0_7, %c0_8, %c0_9], %12 {strides = array<i32>} : memref<1x8x32xf32, #tpu.memory_space<vmem>>, vector<1x8x32xf32>,
    return
  }
  func.func @transform_0(%arg0: i32, %arg1: i32) -> (i32, i32, i32) {
    %c0_i32 = arith.constant 0 : i32
    %c0_i32_0 = arith.constant 0 : i32
    return %arg0, %arg1, %c0_i32 : i32, i32, i32
  }
  func.func @transform_1(%arg0: i32, %arg1: i32) -> (i32, i32) {
    %c0_i32 = arith.constant 0 : i32
    %c0_i32_0 = arith.constant 0 : i32
    %c0_i32_1 = arith.constant 0 : i32
    return %c0_i32, %c0_i32_0 : i32, i32
  }
  func.func @transform_2(%arg0: i32, %arg1: i32) -> (i32, i32) {
    %c0_i32 = arith.constant 0 : i32
    %c0_i32_0 = arith.constant 0 : i32
    %c0_i32_1 = arith.constant 0 : i32
    return %c0_i32, %c0_i32_0 : i32, i32
  }
  func.func @transform_3(%arg0: i32, %arg1: i32) -> i32 {
    %c0_i32 = arith.constant 0 : i32
    %c0_i32_0 = arith.constant 0 : i32
    return %c0_i32 : i32
  }
  func.func @transform_4(%arg0: i32, %arg1: i32) -> (i32, i32, i32) {
    %c0_i32 = arith.constant 0 : i32
    %c0_i32_0 = arith.constant 0 : i32
    return %arg0, %arg1, %c0_i32 : i32, i32, i32
  }
}

</mosaic_0001>

<llo_original>
// kernel: tpu_custom_call.1
$region0: #{tpu_custom_call.1}
  #allocation0 [shape = 'u32[]', space=smem, size = 0x4, offset = 0x4, fixed_abs, tag = 'smem constant byte address 0x4 - core index']
  #allocation1 [shape = 'u32[144,128]{1,0:T(1,128)}', space=vmem, size = 0x12000, scoped, tag = 'internal scratch']
  %s0 = inlined_call_operand.vmem [shape: f32[2,8,32], index: 0, kind: input, shape index: {}]
  %s1 = inlined_call_operand.vmem [shape: f32[32,4], index: 1, kind: input, shape index: {}]
  %s2 = inlined_call_operand.vmem [shape: f32[4,32], index: 2, kind: input, shape index: {}]
  %s3 = inlined_call_operand.vmem [shape: f32[2], index: 3, kind: input, shape index: {}]
  %s4 = inlined_call_operand.hbm [shape: f32[2,8,32], index: 4, kind: output, shape index: {}]
  %s5 = sld [smem:[#allocation0]]
  $region53: #{tpu_custom_call.1} parent=0
    _
  %s7 = ssub.s32 1, %s5
  %s8 = scalar_select 0, %s7, %s5
  $region1: #{tpu_custom_call.1} parent=0
    #allocation2 [shape = 'u8[512]{0}', space=smem, size = 0x200, scoped, tag = 'input window, operand 3, single buffered']
    #allocation3 [shape = 's32[2]{0}', space=sflag, size = 0x8, scoped, tag = 'scoped memory for tpu_custom_call.1']
    #allocation4 [shape = 's32[2]{0}', space=sflag, size = 0x8, scoped, tag = 'scoped memory for tpu_custom_call.1']
    #allocation5 [shape = 'u8[8192]{0}', space=vmem, size = 0x2000, scoped, tag = 'output window, operand 0']
    %9 = vsyncpa [#allocation4], 0
    %10 = vsyncpa [#allocation3], 0
    %s11 = scalar_lea.sflag [#allocation3], 1
    %12 = vsyncpa %s11, 0
    loop: start=0, step=1, limit=4
    $region2: #{tpu_custom_call.1} parent=1 // loop_pre_header
      _
    $region3: #{tpu_custom_call.1} parent=1 // loop_header
      %s14 = sphi 0, %s18
      %p15 = scmp.ge.s32.totalorder %s14, 4
      %s21 = sphi 0, %s33
      %s22 = sphi 0, %s29
      %s23 = sphi 0, %s21
      %s24 = sphi 0, %s22
      %s25 = sphi 0, %s23
      %s26 = sphi 0, %s24
      %s38 = sphi 0, %s40
      %s41 = sphi 0, %s38
      %s42 = sphi 0, %s41
      %s58 = sphi 0, %s42
      %s62 = sphi 0, %s62
      %s64 = sphi 0, %s62
      %s65 = sphi 0, %s64
      %s79 = sphi 0, %s65
      %s83 = sphi 0, %s83
      %s85 = sphi 0, %s83
      %s86 = sphi 0, %s85
      %s100 = sphi 0, %s86
      %s104 = sphi 0, %s104
      %s106 = sphi 0, %s104
      %s107 = sphi 0, %s106
      %s121 = sphi 0, %s107
      %s129 = sphi 0, %s131
      %s132 = sphi 0, %s129
      %s133 = sphi 0, %s132
      %s149 = sphi 0, %s133
    $region4: #{tpu_custom_call.1} parent=1 // loop_header_branch
      %17 = sbr.rel (%p15) target = $region8
    $region5: #{tpu_custom_call.1} parent=1 // loop_body
      %s19 = ssub.s32 %s14, 1
      %s20 = ssub.s32 %s14, 2
      %s27 = sadd.s32 1, %s22
      %p28 = scmp.ge.s32.totalorder %s27, 1
      %s29 = scalar_select %p28, 0, %s27
      %s30 = sadd.s32 1, %s21
      %s31 = scalar_select %p28, %s30, %s21
      %p32 = scmp.ge.s32.totalorder %s31, 2
      %s33 = scalar_select %p32, 0, %s31
      %s34 = ssub.s32 %s21, %s33
      %s35 = ssub.s32 %s22, %s29
      %s36 = sor.u32 %s34, %s35
      %p37 = scmp.eq.s32.totalorder %s36, 0
      %s39 = sadd.s32 %s38, 1
      %s40 = scalar_select %p37, %s38, %s39
      %p43 = pneg %p37
      %p44 = scmp.eq.s32.totalorder %s14, 1
      %p45 = por %p43, %p44
      %p46 = scmp.ne.s32.totalorder %s38, %s41
      %p47 = scmp.eq.s32.totalorder %s14, 0
      %p48 = por %p46, %p47
      %p49 = scmp.ne.s32.totalorder %s38, %s41
      %p50 = scmp.eq.s32.totalorder %s19, 1
      %p51 = por %p49, %p50
      %p52 = scmp.ne.s32.totalorder %s41, %s42
      %p53 = scmp.eq.s32.totalorder %s19, 0
      %p54 = por %p52, %p53
      %p55 = scmp.ne.s32.totalorder %s41, %s42
      %p56 = scmp.eq.s32.totalorder %s20, 1
      %p57 = por %p55, %p56
      %p59 = scmp.ne.s32.totalorder %s42, %s58
      %p60 = scmp.eq.s32.totalorder %s20, 0
      %p61 = por %p59, %p60
      %s63 = sadd.s32 %s62, 1
      %p66 = scmp.eq.s32.totalorder %s14, 1
      %p67 = scmp.ne.s32.totalorder %s62, %s64
      %p68 = scmp.eq.s32.totalorder %s14, 0
      %p69 = por %p67, %p68
      %p70 = scmp.ne.s32.totalorder %s62, %s64
      %p71 = scmp.eq.s32.totalorder %s19, 1
      %p72 = por %p70, %p71
      %p73 = scmp.ne.s32.totalorder %s64, %s65
      %p74 = scmp.eq.s32.totalorder %s19, 0
      %p75 = por %p73, %p74
      %p76 = scmp.ne.s32.totalorder %s64, %s65
      %p77 = scmp.eq.s32.totalorder %s20, 1
      %p78 = por %p76, %p77
      %p80 = scmp.ne.s32.totalorder %s65, %s79
      %p81 = scmp.eq.s32.totalorder %s20, 0
      %p82 = por %p80, %p81
      %s84 = sadd.s32 %s83, 1
      %p87 = scmp.eq.s32.totalorder %s14, 1
      %p88 = scmp.ne.s32.totalorder %s83, %s85
      %p89 = scmp.eq.s32.totalorder %s14, 0
      %p90 = por %p88, %p89
      %p91 = scmp.ne.s32.totalorder %s83, %s85
      %p92 = scmp.eq.s32.totalorder %s19, 1
      %p93 = por %p91, %p92
      %p94 = scmp.ne.s32.totalorder %s85, %s86
      %p95 = scmp.eq.s32.totalorder %s19, 0
      %p96 = por %p94, %p95
      %p97 = scmp.ne.s32.totalorder %s85, %s86
      %p98 = scmp.eq.s32.totalorder %s20, 1
      %p99 = por %p97, %p98
      %p101 = scmp.ne.s32.totalorder %s86, %s100
      %p102 = scmp.eq.s32.totalorder %s20, 0
      %p103 = por %p101, %p102
      %s105 = sadd.s32 %s104, 1
      %p108 = scmp.eq.s32.totalorder %s14, 1
      %p109 = scmp.ne.s32.totalorder %s104, %s106
      %p110 = scmp.eq.s32.totalorder %s14, 0
      %p111 = por %p109, %p110
      %p112 = scmp.ne.s32.totalorder %s104, %s106
      %p113 = scmp.eq.s32.totalorder %s19, 1
      %p114 = por %p112, %p113
      %p115 = scmp.ne.s32.totalorder %s106, %s107
      %p116 = scmp.eq.s32.totalorder %s19, 0
      %p117 = por %p115, %p116
      %p118 = scmp.ne.s32.totalorder %s106, %s107
      %p119 = scmp.eq.s32.totalorder %s20, 1
      %p120 = por %p118, %p119
      %p122 = scmp.ne.s32.totalorder %s107, %s121
      %p123 = scmp.eq.s32.totalorder %s20, 0
      %p124 = por %p122, %p123
      %s125 = ssub.s32 %s21, %s33
      %s126 = ssub.s32 %s22, %s29
      %s127 = sor.u32 %s125, %s126
      %p128 = scmp.eq.s32.totalorder %s127, 0
      %s130 = sadd.s32 %s129, 1
      %s131 = scalar_select %p128, %s129, %s130
      %p134 = pneg %p128
      %p135 = scmp.eq.s32.totalorder %s14, 1
      %p136 = por %p134, %p135
      %p137 = scmp.ne.s32.totalorder %s129, %s132
      %p138 = scmp.eq.s32.totalorder %s14, 0
      %p139 = por %p137, %p138
      %p140 = scmp.ne.s32.totalorder %s129, %s132
      %p141 = scmp.eq.s32.totalorder %s19, 1
      %p142 = por %p140, %p141
      %p143 = scmp.ne.s32.totalorder %s132, %s133
      %p144 = scmp.eq.s32.totalorder %s19, 0
      %p145 = por %p143, %p144
      %p146 = scmp.ne.s32.totalorder %s132, %s133
      %p147 = scmp.eq.s32.totalorder %s20, 1
      %p148 = por %p146, %p147
      %p150 = scmp.ne.s32.totalorder %s133, %s149
      %p151 = scmp.eq.s32.totalorder %s20, 0
      %p152 = por %p150, %p151
      %p153 = scmp.le.s32.totalorder 1, %s14
      %p154 = scmp.lt.s32.totalorder %s14, 3
      %p155 = pnand %p153, %p154
      %p156 = pneg %p155
      // Predicated region
      $region9: #{tpu_custom_call.1} parent=5 // pred_check
        _
      $region10: #{tpu_custom_call.1} parent=5 // pred_check_branch
        %158 = sbr.rel (%p155) target = $region12
      $region11: #{tpu_custom_call.1} parent=5 // pred_region
        %s159 = ssub.s32 %s14, 1
        // Predicated region
        $region13: #{tpu_custom_call.1} parent=11 // pred_check
          %p160 = pneg %p75
        $region14: #{tpu_custom_call.1} parent=11 // pred_check_branch
          %162 = sbr.rel (%p160) target = $region16
        $region15: #{tpu_custom_call.1} parent=11 // pred_region
          _
        $region16: #{tpu_custom_call.1} parent=11 // pred_fallthru
          _
        // Predicated region
        $region17: #{tpu_custom_call.1} parent=11 // pred_check
          %p163 = pneg %p96
        $region18: #{tpu_custom_call.1} parent=11 // pred_check_branch
          %165 = sbr.rel (%p163) target = $region20
        $region19: #{tpu_custom_call.1} parent=11 // pred_region
          _
        $region20: #{tpu_custom_call.1} parent=11 // pred_fallthru
          _
        // Predicated region
        $region21: #{tpu_custom_call.1} parent=11 // pred_check
          %p166 = pneg %p117
        $region22: #{tpu_custom_call.1} parent=11 // pred_check_branch
          %168 = sbr.rel (%p166) target = $region24
        $region23: #{tpu_custom_call.1} parent=11 // pred_region
          %s170 = ssub.s32 16, 16
          %171 = vsyncadd [#allocation4], %s170
          %s173 = sshll.u32 %s3, 4
          %s174 = int_to_ptr.vmem [resolvable:$true] %s173
          %176 = dma.vmem_to_smem %s174, 16, [#allocation2], [#allocation4]
        $region24: #{tpu_custom_call.1} parent=11 // pred_fallthru
          _
      $region12: #{tpu_custom_call.1} parent=5 // pred_fallthru
        _
      %p177 = scmp.lt.s32.totalorder %s14, 2
      // Predicated region
      $region25: #{tpu_custom_call.1} parent=5 // pred_check
        %p178 = pneg %p177
      $region26: #{tpu_custom_call.1} parent=5 // pred_check_branch
        %180 = sbr.rel (%p178) target = $region28
      $region27: #{tpu_custom_call.1} parent=5 // pred_region
        // Predicated region
        $region29: #{tpu_custom_call.1} parent=27 // pred_check
          %p181 = pneg %p48
        $region30: #{tpu_custom_call.1} parent=27 // pred_check_branch
          %183 = sbr.rel (%p181) target = $region32
        $region31: #{tpu_custom_call.1} parent=27 // pred_region
          %p184 = scmp.lt.s32.totalorder %s21, 1
          %s185 = scalar_select %p184, %s21, 1
          %p186 = scmp.lt.s32.totalorder %s22, 0
          %s187 = scalar_select %p186, %s22, 0
          %s188 = sadd.s32 %s187, %s185
          %s189 = smul.addr %s188, 8
          %s190 = scalar_lea.vmem %s0, %s189
        $region32: #{tpu_custom_call.1} parent=27 // pred_fallthru
          _
      $region28: #{tpu_custom_call.1} parent=5 // pred_fallthru
        _
      %p191 = scmp.le.s32.totalorder 1, %s14
      %p192 = scmp.lt.s32.totalorder %s14, 3
      %p193 = pnand %p191, %p192
      %p194 = pneg %p193
      // Predicated region
      $region33: #{tpu_custom_call.1} parent=5 // pred_check
        _
      $region34: #{tpu_custom_call.1} parent=5 // pred_check_branch
        %196 = sbr.rel (%p193) target = $region36
      $region35: #{tpu_custom_call.1} parent=5 // pred_region
        %s197 = ssub.s32 %s14, 1
        // Predicated region
        $region37: #{tpu_custom_call.1} parent=35 // pred_check
          %p198 = pneg %p117
        $region38: #{tpu_custom_call.1} parent=35 // pred_check_branch
          %200 = sbr.rel (%p198) target = $region40
        $region39: #{tpu_custom_call.1} parent=35 // pred_region
          %201 = dma.done [#allocation4], 16
        $region40: #{tpu_custom_call.1} parent=35 // pred_fallthru
          _
        %202 = sfence
        %p203 = scmp.lt.s32.totalorder %s23, 1
        %s204 = scalar_select %p203, %s23, 1
        %p205 = scmp.lt.s32.totalorder %s24, 0
        %s206 = scalar_select %p205, %s24, 0
        %s207 = sadd.s32 %s206, %s204
        %s208 = smul.addr %s207, 8
        %s209 = scalar_lea.vmem %s0, %s208
        %p210 = pneg %p54
        %p211 = pneg %p51
        %p212 = pneg %p75
        %p213 = pneg %p72
        %p214 = pneg %p96
        %p215 = pneg %p93
        %p216 = pneg %p117
        %p217 = pneg %p114
        %p218 = pneg %p145
        %p219 = pneg %p142
        %s220 = sand.u32 %s132, 1
        %s221 = scalar_lea.sflag [#allocation3], %s220
        %s222 = sand.u32 %s132, 1
        %s223 = smul.addr %s222, 8
        %s224 = scalar_lea.vmem [#allocation5], %s223
        %p225 = scmp.lt.s32.totalorder %s23, 1
        %s226 = scalar_select %p225, %s23, 1
        %p227 = scmp.lt.s32.totalorder %s24, 0
        %s228 = scalar_select %p227, %s24, 0
        %s229 = sadd.s32 %s228, %s226
        %s230 = smul.addr %s229, 8
        %s231 = scalar_lea.vmem %s0, %s230
        %v232 = vld [vmem:[%s231] sm:$0xff]
        %v233 = vld [vmem:[%s1] sm:$0xff]
        %v234 = vld [vmem:[%s1 + $0x8] sm:$0xff]
        %v235 = vld [vmem:[%s1 + $0x10] sm:$0xff]
        %v236 = vld [vmem:[%s1 + $0x18] sm:$0xff]
        %vm237 = vcmask 261120
        %v239 = vsel %vm237, %v232, 0
        %241 = vmatprep.subr.mxu0 0.0
        %242 = vmatpush1.msra.mxu0 0.0
        %243 = vmatprep.subr.mxu0 0.0
        %244 = vmatpush1.msra.mxu0 0.0
        %245 = vmatprep.subr.mxu0 0.0
        %246 = vmatpush1.msra.mxu0 0.0
        %247 = vmatprep.subr.mxu0 0.0
        %248 = vmatpush1.msra.mxu0 0.0
        %249 = vmatprep.subr.mxu0 0.0
        %250 = vmatpush1.msra.mxu0 0.0
        %251 = vmatprep.subr.mxu0 0.0
        %252 = vmatpush1.msra.mxu0 0.0
        %253 = vmatprep.subr.mxu0 0.0
        %254 = vmatpush1.msra.mxu0 0.0
        %255 = vmatprep.subr.mxu0 0.0
        %256 = vmatpush1.msra.mxu0 0.0
        %257 = vmatprep.subr.mxu0 0.0
        %258 = vmatpush1.msra.mxu0 0.0
        %259 = vmatprep.subr.mxu0 0.0
        %260 = vmatpush1.msra.mxu0 0.0
        %261 = vmatprep.subr.mxu0 0.0
        %262 = vmatpush1.msra.mxu0 0.0
        %263 = vmatprep.subr.mxu0 0.0
        %264 = vmatpush1.msra.mxu0 0.0
        %265 = vmatprep.subr.mxu0 0.0
        %266 = vmatpush1.msra.mxu0 %v236
        %267 = vmatprep.subr.mxu0 0.0
        %268 = vmatpush1.msra.mxu0 %v235
        %269 = vmatprep.subr.mxu0 0.0
        %270 = vmatpush1.msra.mxu0 %v234
        %271 = vmatprep.subr.mxu0 0.0
        %272 = vmatpush1.msra.mxu0 %v233
        %273 = vmatprep.subr.mxu0 0.0
        %274 = vmatpush2.msra.mxu0 0.0
        %275 = vmatprep.subr.mxu0 0.0
        %276 = vmatpush2.msra.mxu0 0.0
        %277 = vmatprep.subr.mxu0 0.0
        %278 = vmatpush2.msra.mxu0 0.0
        %279 = vmatprep.subr.mxu0 0.0
        %280 = vmatpush2.msra.mxu0 0.0
        %281 = vmatprep.subr.mxu0 0.0
        %282 = vmatpush2.msra.mxu0 0.0
        %283 = vmatprep.subr.mxu0 0.0
        %284 = vmatpush2.msra.mxu0 0.0
        %285 = vmatprep.subr.mxu0 0.0
        %286 = vmatpush2.msra.mxu0 0.0
        %287 = vmatprep.subr.mxu0 0.0
        %288 = vmatpush2.msra.mxu0 0.0
        %289 = vmatprep.subr.mxu0 0.0
        %290 = vmatpush2.msra.mxu0 0.0
        %291 = vmatprep.subr.mxu0 0.0
        %292 = vmatpush2.msra.mxu0 0.0
        %293 = vmatprep.subr.mxu0 0.0
        %294 = vmatpush2.msra.mxu0 0.0
        %295 = vmatprep.subr.mxu0 0.0
        %296 = vmatpush2.msra.mxu0 0.0
        %297 = vmatprep.subr.mxu0 0.0
        %298 = vmatpush2.msra.mxu0 0.0
        %299 = vmatprep.subr.mxu0 0.0
        %300 = vmatpush2.msra.mxu0 0.0
        %301 = vmatprep.subr.mxu0 0.0
        %302 = vmatpush2.msra.mxu0 0.0
        %303 = vmatprep.subr.mxu0 0.0
        %304 = vmatpush2.msra.mxu0 0.0
        %305 = vmatprep.mubr.f32.mxu0 0.0
        %306 = vmatmul.mubr.f32.gmra.mxu0 %v239
        %v307 = vpop.f32.mrf.mxu0
        %v308 = vadd.f32 0.0, %v307
        %v309 = vpop.f32.mrf.mxu0
        %310 = vdwg.mxu0
        %v311 = vld [vmem:[%s2] sm:$0xf]
        %vm312 = vcmask 31744
        %v314 = vsel %vm312, %v308, 0
        %vm316 = vcmask 1043456
        %v318 = vsel %vm316, %v311, 0
        %320 = vmatprep.subr.mxu0 0.0
        %321 = vmatpush1.msra.mxu0 0.0
        %322 = vmatprep.subr.mxu0 0.0
        %323 = vmatpush1.msra.mxu0 0.0
        %324 = vmatprep.subr.mxu0 0.0
        %325 = vmatpush1.msra.mxu0 0.0
        %326 = vmatprep.subr.mxu0 0.0
        %327 = vmatpush1.msra.mxu0 0.0
        %328 = vmatprep.subr.mxu0 0.0
        %329 = vmatpush1.msra.mxu0 0.0
        %330 = vmatprep.subr.mxu0 0.0
        %331 = vmatpush1.msra.mxu0 0.0
        %332 = vmatprep.subr.mxu0 0.0
        %333 = vmatpush1.msra.mxu0 0.0
        %334 = vmatprep.subr.mxu0 0.0
        %335 = vmatpush1.msra.mxu0 0.0
        %336 = vmatprep.subr.mxu0 0.0
        %337 = vmatpush1.msra.mxu0 0.0
        %338 = vmatprep.subr.mxu0 0.0
        %339 = vmatpush1.msra.mxu0 0.0
        %340 = vmatprep.subr.mxu0 0.0
        %341 = vmatpush1.msra.mxu0 0.0
        %342 = vmatprep.subr.mxu0 0.0
        %343 = vmatpush1.msra.mxu0 0.0
        %344 = vmatprep.subr.mxu0 0.0
        %345 = vmatpush1.msra.mxu0 0.0
        %346 = vmatprep.subr.mxu0 0.0
        %347 = vmatpush1.msra.mxu0 0.0
        %348 = vmatprep.subr.mxu0 0.0
        %349 = vmatpush1.msra.mxu0 0.0
        %350 = vmatprep.subr.mxu0 0.0
        %351 = vmatpush1.msra.mxu0 %v318
        %352 = vmatprep.subr.mxu0 0.0
        %353 = vmatpush2.msra.mxu0 0.0
        %354 = vmatprep.subr.mxu0 0.0
        %355 = vmatpush2.msra.mxu0 0.0
        %356 = vmatprep.subr.mxu0 0.0
        %357 = vmatpush2.msra.mxu0 0.0
        %358 = vmatprep.subr.mxu0 0.0
        %359 = vmatpush2.msra.mxu0 0.0
        %360 = vmatprep.subr.mxu0 0.0
        %361 = vmatpush2.msra.mxu0 0.0
        %362 = vmatprep.subr.mxu0 0.0
        %363 = vmatpush2.msra.mxu0 0.0
        %364 = vmatprep.subr.mxu0 0.0
        %365 = vmatpush2.msra.mxu0 0.0
        %366 = vmatprep.subr.mxu0 0.0
        %367 = vmatpush2.msra.mxu0 0.0
        %368 = vmatprep.subr.mxu0 0.0
        %369 = vmatpush2.msra.mxu0 0.0
        %370 = vmatprep.subr.mxu0 0.0
        %371 = vmatpush2.msra.mxu0 0.0
        %372 = vmatprep.subr.mxu0 0.0
        %373 = vmatpush2.msra.mxu0 0.0
        %374 = vmatprep.subr.mxu0 0.0
        %375 = vmatpush2.msra.mxu0 0.0
        %376 = vmatprep.subr.mxu0 0.0
        %377 = vmatpush2.msra.mxu0 0.0
        %378 = vmatprep.subr.mxu0 0.0
        %379 = vmatpush2.msra.mxu0 0.0
        %380 = vmatprep.subr.mxu0 0.0
        %381 = vmatpush2.msra.mxu0 0.0
        %382 = vmatprep.subr.mxu0 0.0
        %383 = vmatpush2.msra.mxu0 0.0
        %384 = vmatprep.mubr.f32.mxu0 0.0
        %385 = vmatmul.mubr.f32.gmra.mxu0 %v314
        %v386 = vpop.f32.mrf.mxu0
        %v387 = vadd.f32 0.0, %v386
        %v388 = vpop.f32.mrf.mxu0
        %389 = vdwg.mxu0
        %s390 = sld [smem:[#allocation2 + %s23]]
        %v391 = vstv %s390
        %v392 = vmul.f32 %v387, %v391
        %393 = vst.msk [vmem:[%s224] sm:$0xff] %vm237, %v392
        %s394 = sand.u32 %s132, 1
        %s395 = scalar_lea.sflag [#allocation3], %s394
        %s396 = sand.u32 %s132, 1
        %s397 = smul.addr %s396, 8
        %s398 = scalar_lea.vmem [#allocation5], %s397
        // Predicated region
        $region41: #{tpu_custom_call.1} parent=35 // pred_check
          %p399 = pneg %p142
        $region42: #{tpu_custom_call.1} parent=35 // pred_check_branch
          %401 = sbr.rel (%p399) target = $region44
        $region43: #{tpu_custom_call.1} parent=35 // pred_region
          %s403 = ssub.s32 128, 128
          %404 = vsyncadd %s395, %s403
          %s405 = sadd.s32 %s24, %s23
          %s406 = smul.addr %s405, 128
          %s407 = scalar_lea.hbm %s4, %s406
          %s409 = sshll.u32 %s398, 4
          %s410 = int_to_ptr.vmem [resolvable:$true] %s409
          %412 = dma.vmem_to_hbm [thread:$0]  %s410, 128, %s407, %s395
        $region44: #{tpu_custom_call.1} parent=35 // pred_fallthru
          _
      $region36: #{tpu_custom_call.1} parent=5 // pred_fallthru
        _
      %p413 = scmp.le.s32.totalorder 2, %s14
      // Predicated region
      $region45: #{tpu_custom_call.1} parent=5 // pred_check
        %p414 = pneg %p413
      $region46: #{tpu_custom_call.1} parent=5 // pred_check_branch
        %416 = sbr.rel (%p414) target = $region48
      $region47: #{tpu_custom_call.1} parent=5 // pred_region
        %s417 = ssub.s32 %s14, 2
        // Predicated region
        $region49: #{tpu_custom_call.1} parent=47 // pred_check
          %p418 = pneg %p148
        $region50: #{tpu_custom_call.1} parent=47 // pred_check_branch
          %420 = sbr.rel (%p418) target = $region52
        $region51: #{tpu_custom_call.1} parent=47 // pred_region
          %s421 = sand.u32 %s133, 1
          %s422 = scalar_lea.sflag [#allocation3], %s421
          %s423 = sand.u32 %s133, 1
          %s424 = smul.addr %s423, 8
          %s425 = scalar_lea.vmem [#allocation5], %s424
          %426 = dma.done %s422, 128
        $region52: #{tpu_custom_call.1} parent=47 // pred_fallthru
          _
      $region48: #{tpu_custom_call.1} parent=5 // pred_fallthru
        _
    $region6: #{tpu_custom_call.1} parent=1 // loop_footer
      %s18 = sadd.s32 1, %s14
    $region7: #{tpu_custom_call.1} parent=1 // loop_footer_branch
      %13 = sbr.rel target = $region3
    $region8: #{tpu_custom_call.1} parent=1 // loop_exit
      _
    %427 = vsyncpa [#allocation3], 1
    %s428 = scalar_lea.sflag [#allocation3], 1
    %429 = vsyncpa %s428, 1
    %430 = vsyncpa [#allocation4], 1
    %s431 = scalar_lea.sflag [#allocation4], 1
    %432 = vsyncpa %s431, 1

</llo_original>
